<compile_context>
chip_gen: v5e
topology: v5e:2x2
jax: 0.10.0
libtpu: 0.0.40
codegen_flags: <defaults>
</compile_context>

<pallas_src>
import jax
import jax.numpy as jnp
from jax.experimental import pallas as pl
from jax.experimental.pallas import tpu as pltpu


# ---------------------------------------------------------------------------
# Kernel: one (D_out tile j, batch tile i, contraction tile k) grid step.
# ---------------------------------------------------------------------------
def _matmul_bias_kernel(x_ref, w_ref, b_ref, o_ref, acc_ref):
    """x_ref: (tb, tk)  w_ref: (tk, tn)  b_ref: (1, tn) f32
    o_ref: (tb, tn) out dtype   acc_ref: (tb, tn) f32 scratch (resident over k)."""
    k = pl.program_id(2)

    @pl.when(k == 0)
    def _():
        # Initialize the accumulator with the (already weight-combined) bias.
        acc_ref[...] = jnp.broadcast_to(b_ref[...], acc_ref.shape)

    acc_ref[...] += jnp.dot(x_ref[...], w_ref[...],
                            preferred_element_type=jnp.float32)

    @pl.when(k == pl.num_programs(2) - 1)
    def _():
        o_ref[...] = acc_ref[...].astype(o_ref.dtype)


# ---------------------------------------------------------------------------
# Tiling helpers.
# ---------------------------------------------------------------------------
def _round_up(n, m):
    return ((n + m - 1) // m) * m


def _pow2_tile(dim, candidates):
    """Largest power-of-two candidate dividing dim (dim is pre-padded so the
    smallest candidate always divides)."""
    for c in candidates:
        if dim % c == 0:
            return c
    return dim


def _vmem_capacity_bytes():
    try:
        return int(pltpu.get_tpu_info().vmem_capacity_bytes)
    except Exception:
        return 64 * 1024 * 1024  # conservative (v7x per-TC)


def _choose_tiles(b_pad, do_pad, di_pad, in_itemsize, out_itemsize, capacity):
    tb = _pow2_tile(b_pad, (1024, 512, 256, 128, 64, 32, 16, 8))
    tn = _pow2_tile(do_pad, (512, 256, 128))
    tk = _pow2_tile(di_pad, (2048, 1024, 512, 256, 128))

    def est(tb_, tn_, tk_):
        return (2 * tb_ * tk_ * in_itemsize      # x tile, double-buffered
                + 2 * tk_ * tn_ * in_itemsize    # W_eff tile, double-buffered
                + 2 * tb_ * tn_ * out_itemsize   # output tile, double-buffered
                + tb_ * tn_ * 4                  # f32 accumulator scratch
                + 2 * tn_ * 4)                   # bias tile

    budget = int(0.45 * capacity)
    while est(tb, tn, tk) > budget:
        if tk >= 256 and tk >= max(tb, tn):
            tk //= 2
        elif tb >= 32 and tb >= tn:
            tb //= 2
        elif tn >= 256:
            tn //= 2
        elif tk >= 256:
            tk //= 2
        elif tb >= 16:
            tb //= 2
        else:
            break
    return tb, tn, tk, est(tb, tn, tk)


# ---------------------------------------------------------------------------
# Wrapper.
# ---------------------------------------------------------------------------
def linear_combination_ensemble(x, W, b, weight_logits, *,
                                compute_dtype=jnp.bfloat16):
    """out = sum_m softmax(weight_logits)_m * (x @ W[m].T + b[m]).

    x: [B, D_in], W: [M, D_out, D_in], b: [M, D_out], weight_logits: [M].
    """
    M, D_out, D_in = W.shape
    B = x.shape[0]
    assert M > 1
    out_dtype = x.dtype

    # --- tiny XLA glue: softmax + algebraic collapse of the linear ensemble --
    weights = jax.nn.softmax(weight_logits.astype(jnp.float32), axis=0)       # (M,)
    # W_eff^T in "io" layout so the kernel does a plain x @ W (no XLU transpose).
    # Accumulate the member sum in f32, cast to compute dtype once.
    w_eff_t = jnp.einsum("m,moi->io", weights, W.astype(jnp.float32),
                         preferred_element_type=jnp.float32)                  # (D_in, D_out)
    b_eff = jnp.einsum("m,mo->o", weights, b.astype(jnp.float32))[None, :]    # (1, D_out)

    x_c = x.astype(compute_dtype)
    w_c = w_eff_t.astype(compute_dtype)

    # --- padding for lane-dense stores and (8,128)-aligned tiles -------------
    B_pad = _round_up(B, 8)
    Do_pad = _round_up(D_out, 128)
    Di_pad = _round_up(D_in, 128)
    if (B_pad, Di_pad) != (B, D_in):
        x_c = jnp.pad(x_c, ((0, B_pad - B), (0, Di_pad - D_in)))
    if (Di_pad, Do_pad) != (D_in, D_out):
        w_c = jnp.pad(w_c, ((0, Di_pad - D_in), (0, Do_pad - D_out)))
    if Do_pad != D_out:
        b_eff = jnp.pad(b_eff, ((0, 0), (0, Do_pad - D_out)))

    # --- per-generation tiling -----------------------------------------------
    in_sz = jnp.dtype(compute_dtype).itemsize
    out_sz = jnp.dtype(out_dtype).itemsize
    capacity = _vmem_capacity_bytes()
    tb, tn, tk, vmem_est = _choose_tiles(B_pad, Do_pad, Di_pad, in_sz, out_sz,
                                         capacity)

    # D_out axis leads so the v7x megacore still shards when B_pad // tb == 1.
    grid = (Do_pad // tn, B_pad // tb, Di_pad // tk)

    vmem_limit = int(min(0.85 * capacity,
                         max(4 * vmem_est, 32 * 1024 * 1024)))

    cost = pl.CostEstimate(
        flops=2 * B_pad * Do_pad * Di_pad,
        transcendentals=0,
        bytes_accessed=(grid[0] * x_c.size * in_sz      # x re-streamed per D_out tile
                        + grid[1] * w_c.size * in_sz    # W_eff re-streamed per batch tile
                        + B_pad * Do_pad * out_sz
                        + Do_pad * 4),
    )

    out = pl.pallas_call(
        _matmul_bias_kernel,
        out_shape=jax.ShapeDtypeStruct((B_pad, Do_pad), out_dtype),
        grid_spec=pltpu.PrefetchScalarGridSpec(
            num_scalar_prefetch=0,
            grid=grid,
            in_specs=[
                pl.BlockSpec((tb, tk), lambda j, i, k: (i, k)),   # x tile
                pl.BlockSpec((tk, tn), lambda j, i, k: (k, j)),   # W_eff^T tile
                pl.BlockSpec((1, tn), lambda j, i, k: (0, j)),    # bias tile
            ],
            out_specs=pl.BlockSpec((tb, tn), lambda j, i, k: (i, j)),
            scratch_shapes=[pltpu.VMEM((tb, tn), jnp.float32)],
        ),
        compiler_params=pltpu.CompilerParams(
            dimension_semantics=("parallel", "parallel", "arbitrary"),
            vmem_limit_bytes=vmem_limit,
        ),
        cost_estimate=cost,
    )(x_c, w_c, b_eff)

    if (B_pad, Do_pad) != (B, D_out):
        out = out[:B, :D_out]
    return out


# ---------------------------------------------------------------------------
# Test.
# ---------------------------------------------------------------------------
if __name__ == "__main__":
    # Small deterministic setup: M=3 ensemble members, linear models D_in -> D_out.
    M, B, D_in, D_out = 3, 16, 128, 256

    key = jax.random.PRNGKey(0)
    kx, kw, kb = jax.random.split(key, 3)

    x = jax.random.normal(kx, (B, D_in), dtype=jnp.float32)
    W = jax.random.normal(kw, (M, D_out, D_in), dtype=jnp.float32) * 0.1
    b = jax.random.normal(kb, (M, D_out), dtype=jnp.float32) * 0.1
    weight_logits = jnp.array([0.5, -0.25, 0.1], dtype=jnp.float32)

    # Module-faithful pure-JAX reference (per-member weighted predictions, f32).
    w_sm = jax.nn.softmax(weight_logits, axis=0)
    preds = jnp.einsum("bi,moi->mbo", x, W,
                       preferred_element_type=jnp.float32) + b[:, None, :]
    ref = jnp.sum(w_sm[:, None, None] * preds, axis=0)           # (B, D_out)

    # 1) f32 compute path: exact semantic parity with the PyTorch module.
    out_f32 = jax.block_until_ready(
        linear_combination_ensemble(x, W, b, weight_logits,
                                    compute_dtype=jnp.float32))
    assert out_f32.shape == (B, D_out)
    err_f32 = jnp.max(jnp.abs(out_f32 - ref))
    assert jnp.allclose(out_f32, ref, atol=1e-4, rtol=1e-4), f"f32 max err {err_f32}"

    # 2) bf16 compute path (fast default): looser tolerance for the downcast.
    out_bf16 = jax.block_until_ready(
        linear_combination_ensemble(x, W, b, weight_logits))
    assert out_bf16.shape == (B, D_out)
    err_bf16 = jnp.max(jnp.abs(out_bf16 - ref))
    assert jnp.allclose(out_bf16, ref, atol=3e-2, rtol=3e-2), f"bf16 max err {err_bf16}"

    print("KERNEL_OK")
</pallas_src>

<mosaic_0001>
module attributes {stable_mosaic.version = 11 : i64} {
  func.func @_matmul_bias_kernel(%arg0: i32, %arg1: i32, %arg2: i32, %arg3: memref<16x128xf32, #tpu.memory_space<vmem>>, %arg4: memref<128x256xf32, #tpu.memory_space<vmem>>, %arg5: memref<1x256xf32, #tpu.memory_space<vmem>>, %arg6: memref<16x256xf32, #tpu.memory_space<vmem>>, %arg7: memref<16x256xf32, #tpu.memory_space<vmem>>) attributes {dimension_semantics = [#tpu.dimension_semantics<parallel>, #tpu.dimension_semantics<parallel>, #tpu.dimension_semantics<arbitrary>], iteration_bounds = array<i64: 1, 1, 1>, scalar_prefetch = 0 : i64, scratch_operands = 1 : i64, tpu.core_type = #tpu.core_type<tc>, window_params = [{transform_indices = @transform_0, window_bounds = array<i64: 16, 128>}, {transform_indices = @transform_1, window_bounds = array<i64: 128, 256>}, {transform_indices = @transform_2, window_bounds = array<i64: 1, 256>}, {transform_indices = @transform_3, window_bounds = array<i64: 16, 256>}]} {
    %c0_i32 = arith.constant 0 : i32
    %0 = arith.cmpi eq, %arg2, %c0_i32 : i32
    %1 = arith.extui %0 : i1 to i32
    %c0_i32_0 = arith.constant 0 : i32
    %2 = arith.cmpi ne, %1, %c0_i32_0 : i32
    scf.if %2 {
      %c0_10 = arith.constant 0 : index
      %c0_11 = arith.constant 0 : index
      %12 = vector.load %arg5[%c0_10, %c0_11] : memref<1x256xf32, #tpu.memory_space<vmem>>, vector<1x256xf32>
      %13 = vector.shape_cast %12 : vector<1x256xf32> to vector<1x256xf32>
      %14 = vector.broadcast %13 : vector<1x256xf32> to vector<16x256xf32>
      %c0_12 = arith.constant 0 : index
      %c0_13 = arith.constant 0 : index
      %15 = vector.load %arg7[%c0_12, %c0_13] : memref<16x256xf32, #tpu.memory_space<vmem>>, vector<16x256xf32>
      tpu.vector_store %arg7[%c0_12, %c0_13], %14 {strides = array<i32>} : memref<16x256xf32, #tpu.memory_space<vmem>>, vector<16x256xf32>,
    } else {
    }
    %c0 = arith.constant 0 : index
    %c0_1 = arith.constant 0 : index
    %3 = vector.load %arg7[%c0, %c0_1] : memref<16x256xf32, #tpu.memory_space<vmem>>, vector<16x256xf32>
    %c0_2 = arith.constant 0 : index
    %c0_3 = arith.constant 0 : index
    %4 = vector.load %arg3[%c0_2, %c0_3] : memref<16x128xf32, #tpu.memory_space<vmem>>, vector<16x128xf32>
    %c0_4 = arith.constant 0 : index
    %c0_5 = arith.constant 0 : index
    %5 = vector.load %arg4[%c0_4, %c0_5] : memref<128x256xf32, #tpu.memory_space<vmem>>, vector<128x256xf32>
    %cst = arith.constant dense<0.000000e+00> : vector<16x256xf32>
    %6 = tpu.matmul %4, %5, %cst {dimension_numbers = #tpu.dot_dimension_numbers<[1], [0], [0], [1], [0, 0, 1, 1], [], []>} : vector<16x128xf32>, vector<128x256xf32>, vector<16x256xf32> -> vector<16x256xf32>
    %7 = arith.addf %3, %6 : vector<16x256xf32>
    %c0_6 = arith.constant 0 : index
    %c0_7 = arith.constant 0 : index
    %8 = vector.load %arg7[%c0_6, %c0_7] : memref<16x256xf32, #tpu.memory_space<vmem>>, vector<16x256xf32>
    tpu.vector_store %arg7[%c0_6, %c0_7], %7 {strides = array<i32>} : memref<16x256xf32, #tpu.memory_space<vmem>>, vector<16x256xf32>,
    %c0_i32_8 = arith.constant 0 : i32
    %9 = arith.cmpi eq, %arg2, %c0_i32_8 : i32
    %10 = arith.extui %9 : i1 to i32
    %c0_i32_9 = arith.constant 0 : i32
    %11 = arith.cmpi ne, %10, %c0_i32_9 : i32
    scf.if %11 {
      %c0_10 = arith.constant 0 : index
      %c0_11 = arith.constant 0 : index
      %12 = vector.load %arg7[%c0_10, %c0_11] : memref<16x256xf32, #tpu.memory_space<vmem>>, vector<16x256xf32>
      %c0_12 = arith.constant 0 : index
      %c0_13 = arith.constant 0 : index
      %13 = vector.load %arg6[%c0_12, %c0_13] : memref<16x256xf32, #tpu.memory_space<vmem>>, vector<16x256xf32>
      tpu.vector_store %arg6[%c0_12, %c0_13], %12 {strides = array<i32>} : memref<16x256xf32, #tpu.memory_space<vmem>>, vector<16x256xf32>,
    } else {
    }
    return
  }
  func.func @transform_0(%arg0: i32, %arg1: i32, %arg2: i32) -> (i32, i32) {
    %c0_i32 = arith.constant 0 : i32
    return %arg1, %arg2 : i32, i32
  }
  func.func @transform_1(%arg0: i32, %arg1: i32, %arg2: i32) -> (i32, i32) {
    %c0_i32 = arith.constant 0 : i32
    return %arg2, %arg0 : i32, i32
  }
  func.func @transform_2(%arg0: i32, %arg1: i32, %arg2: i32) -> (i32, i32) {
    %c0_i32 = arith.constant 0 : i32
    %c0_i32_0 = arith.constant 0 : i32
    return %c0_i32, %arg0 : i32, i32
  }
  func.func @transform_3(%arg0: i32, %arg1: i32, %arg2: i32) -> (i32, i32) {
    %c0_i32 = arith.constant 0 : i32
    return %arg1, %arg0 : i32, i32
  }
}

</mosaic_0001>

<llo_original>
// kernel: tpu_custom_call.1
$region0: #{tpu_custom_call.1}
  #allocation0 [shape = 'u32[]', space=smem, size = 0x4, offset = 0x4, fixed_abs, tag = 'smem constant byte address 0x4 - core index']
  #allocation1 [shape = 'u32[72,128]{1,0:T(1,128)}', space=vmem, size = 0x9000, scoped, tag = 'internal scratch']
  #allocation2 [shape = 'f32[16,256]{1,0:T(8,128)}', space=vmem, size = 0x4000, scoped, tag = 'scratch operand']
  %s0 = inlined_call_operand.hbm [shape: f32[16,128], index: 0, kind: input, shape index: {}]
  %s1 = inlined_call_operand.hbm [shape: f32[128,256], index: 1, kind: input, shape index: {}]
  %s2 = inlined_call_operand.hbm [shape: f32[1,256], index: 2, kind: input, shape index: {}]
  %s3 = inlined_call_operand.hbm [shape: f32[16,256], index: 3, kind: output, shape index: {}]
  %s4 = sld [smem:[#allocation0]]
  $region42: #{tpu_custom_call.1} parent=0
    _
  %s6 = ssub.s32 1, %s4
  %s7 = scalar_select 0, %s6, %s4
  $region1: #{tpu_custom_call.1} parent=0
    #allocation3 [shape = 'u8[8192]{0}', space=vmem, size = 0x2000, scoped, tag = 'input window, operand 0, single buffered']
    #allocation4 [shape = 's32[1]{0}', space=sflag, size = 0x4, scoped, tag = 'scoped memory for tpu_custom_call.1']
    #allocation5 [shape = 's32[1]{0}', space=sflag, size = 0x4, scoped, tag = 'scoped memory for tpu_custom_call.1']
    #allocation6 [shape = 'u8[131072]{0}', space=vmem, size = 0x20000, scoped, tag = 'input window, operand 1, single buffered']
    #allocation7 [shape = 's32[1]{0}', space=sflag, size = 0x4, scoped, tag = 'scoped memory for tpu_custom_call.1']
    #allocation8 [shape = 'u8[1024]{0}', space=vmem, size = 0x400, scoped, tag = 'input window, operand 2, single buffered']
    #allocation9 [shape = 'u8[16384]{0}', space=vmem, size = 0x4000, scoped, tag = 'output window, operand 0, single buffered']
    %8 = vsyncpa [#allocation4], 0
    %9 = vsyncpa [#allocation7], 0
    %10 = vsyncpa [#allocation5], 0
    // Predicated region
    $region2: #{tpu_custom_call.1} parent=1 // pred_check
      _
    $region3: #{tpu_custom_call.1} parent=1 // pred_check_branch
      %12 = sbr.rel (0) target = $region5
    $region4: #{tpu_custom_call.1} parent=1 // pred_region
      %14 = vsyncadd [#allocation4], 0
      %s15 = sshll.u32 %s0, 4
      %s16 = int_to_ptr.hbm [resolvable:$true] %s15
      %s17 = sshll.u32 [#allocation3], 4
      %s18 = int_to_ptr.vmem [resolvable:$true] %s17
      %23 = dma.hbm_to_vmem [thread:$0]  %s16, 256, %s18, [#allocation4], 128, 128, 8
    $region5: #{tpu_custom_call.1} parent=1 // pred_fallthru
      _
    // Predicated region
    $region6: #{tpu_custom_call.1} parent=1 // pred_check
      _
    $region7: #{tpu_custom_call.1} parent=1 // pred_check_branch
      %25 = sbr.rel (0) target = $region9
    $region8: #{tpu_custom_call.1} parent=1 // pred_region
      %27 = vsyncadd [#allocation7], 0
      %s28 = sshll.u32 %s1, 4
      %s29 = int_to_ptr.hbm [resolvable:$true] %s28
      %s30 = sshll.u32 [#allocation6], 4
      %s31 = int_to_ptr.vmem [resolvable:$true] %s30
      %36 = dma.hbm_to_vmem [thread:$0]  %s29, 4096, %s31, [#allocation7], 256, 256, 16
    $region9: #{tpu_custom_call.1} parent=1 // pred_fallthru
      _
    // Predicated region
    $region10: #{tpu_custom_call.1} parent=1 // pred_check
      _
    $region11: #{tpu_custom_call.1} parent=1 // pred_check_branch
      %38 = sbr.rel (0) target = $region13
    $region12: #{tpu_custom_call.1} parent=1 // pred_region
      %40 = vsyncadd [#allocation7], 0
      %s42 = sshll.u32 %s2, 4
      %s43 = int_to_ptr.hbm [resolvable:$true] %s42
      %s44 = sshll.u32 [#allocation8], 4
      %s45 = int_to_ptr.vmem [resolvable:$true] %s44
      %47 = dma.hbm_to_vmem [thread:$0]  %s43, 32, %s45, [#allocation7]
    $region13: #{tpu_custom_call.1} parent=1 // pred_fallthru
      _
    // Predicated region
    $region14: #{tpu_custom_call.1} parent=1 // pred_check
      _
    $region15: #{tpu_custom_call.1} parent=1 // pred_check_branch
      %49 = sbr.rel (0) target = $region17
    $region16: #{tpu_custom_call.1} parent=1 // pred_region
      %51 = dma.done [#allocation4], 256
    $region17: #{tpu_custom_call.1} parent=1 // pred_fallthru
      _
    // Predicated region
    $region18: #{tpu_custom_call.1} parent=1 // pred_check
      _
    $region19: #{tpu_custom_call.1} parent=1 // pred_check_branch
      %53 = sbr.rel (0) target = $region21
    $region20: #{tpu_custom_call.1} parent=1 // pred_region
      %55 = dma.done [#allocation7], 4096
    $region21: #{tpu_custom_call.1} parent=1 // pred_fallthru
      _
    // Predicated region
    $region22: #{tpu_custom_call.1} parent=1 // pred_check
      _
    $region23: #{tpu_custom_call.1} parent=1 // pred_check_branch
      %57 = sbr.rel (0) target = $region25
    $region24: #{tpu_custom_call.1} parent=1 // pred_region
      %59 = dma.done [#allocation7], 32
    $region25: #{tpu_custom_call.1} parent=1 // pred_fallthru
      _
    %p60 = scmp.eq.s32.totalorder 0, 0
    // Predicated region
    $region26: #{tpu_custom_call.1} parent=1 // pred_check
      %p61 = pneg %p60
    $region27: #{tpu_custom_call.1} parent=1 // pred_check_branch
      %63 = sbr.rel (%p61) target = $region29
    $region28: #{tpu_custom_call.1} parent=1 // pred_region
      %v64 = vld [vmem:[#allocation8] sm:$0x3]
      %v66 = vperm.slane %v64, 0
      %v67 = vperm.slane %v64, 1
      %70 = vst [vmem:[#allocation2] sm:$0xff] %v66
      %71 = vst [vmem:[#allocation2 + $0x8] sm:$0xff] %v67
      %72 = vst [vmem:[#allocation2 + $0x10] sm:$0xff] %v66
      %73 = vst [vmem:[#allocation2 + $0x18] sm:$0xff] %v67
    $region29: #{tpu_custom_call.1} parent=1 // pred_fallthru
      _
    %v74 = vld [vmem:[#allocation2] sm:$0xff]
    %v75 = vld [vmem:[#allocation2 + $0x8] sm:$0xff]
    %v76 = vld [vmem:[#allocation2 + $0x10] sm:$0xff]
    %v77 = vld [vmem:[#allocation2 + $0x18] sm:$0xff]
    %v78 = vld [vmem:[#allocation3] sm:$0xff]
    %v79 = vld [vmem:[#allocation3 + $0x8] sm:$0xff]
    %v80 = vld [vmem:[#allocation6] sm:$0xff]
    %v81 = vld [vmem:[#allocation6 + $0x8] sm:$0xff]
    %v82 = vld [vmem:[#allocation6 + $0x10] sm:$0xff]
    %v83 = vld [vmem:[#allocation6 + $0x18] sm:$0xff]
    %v84 = vld [vmem:[#allocation6 + $0x20] sm:$0xff]
    %v85 = vld [vmem:[#allocation6 + $0x28] sm:$0xff]
    %v86 = vld [vmem:[#allocation6 + $0x30] sm:$0xff]
    %v87 = vld [vmem:[#allocation6 + $0x38] sm:$0xff]
    %v88 = vld [vmem:[#allocation6 + $0x40] sm:$0xff]
    %v89 = vld [vmem:[#allocation6 + $0x48] sm:$0xff]
    %v90 = vld [vmem:[#allocation6 + $0x50] sm:$0xff]
    %v91 = vld [vmem:[#allocation6 + $0x58] sm:$0xff]
    %v92 = vld [vmem:[#allocation6 + $0x60] sm:$0xff]
    %v93 = vld [vmem:[#allocation6 + $0x68] sm:$0xff]
    %v94 = vld [vmem:[#allocation6 + $0x70] sm:$0xff]
    %v95 = vld [vmem:[#allocation6 + $0x78] sm:$0xff]
    %v96 = vld [vmem:[#allocation6 + $0x80] sm:$0xff]
    %v97 = vld [vmem:[#allocation6 + $0x88] sm:$0xff]
    %v98 = vld [vmem:[#allocation6 + $0x90] sm:$0xff]
    %v99 = vld [vmem:[#allocation6 + $0x98] sm:$0xff]
    %v100 = vld [vmem:[#allocation6 + $0xa0] sm:$0xff]
    %v101 = vld [vmem:[#allocation6 + $0xa8] sm:$0xff]
    %v102 = vld [vmem:[#allocation6 + $0xb0] sm:$0xff]
    %v103 = vld [vmem:[#allocation6 + $0xb8] sm:$0xff]
    %v104 = vld [vmem:[#allocation6 + $0xc0] sm:$0xff]
    %v105 = vld [vmem:[#allocation6 + $0xc8] sm:$0xff]
    %v106 = vld [vmem:[#allocation6 + $0xd0] sm:$0xff]
    %v107 = vld [vmem:[#allocation6 + $0xd8] sm:$0xff]
    %v108 = vld [vmem:[#allocation6 + $0xe0] sm:$0xff]
    %v109 = vld [vmem:[#allocation6 + $0xe8] sm:$0xff]
    %v110 = vld [vmem:[#allocation6 + $0xf0] sm:$0xff]
    %v111 = vld [vmem:[#allocation6 + $0xf8] sm:$0xff]
    %112 = vmatpush.msra.mxu0 %v110
    %113 = vmatpush.msra.mxu0 %v108
    %114 = vmatpush.msra.mxu0 %v106
    %115 = vmatpush.msra.mxu0 %v104
    %116 = vmatpush.msra.mxu0 %v102
    %117 = vmatpush.msra.mxu0 %v100
    %118 = vmatpush.msra.mxu0 %v98
    %119 = vmatpush.msra.mxu0 %v96
    %120 = vmatpush.msra.mxu0 %v94
    %121 = vmatpush.msra.mxu0 %v92
    %122 = vmatpush.msra.mxu0 %v90
    %123 = vmatpush.msra.mxu0 %v88
    %124 = vmatpush.msra.mxu0 %v86
    %125 = vmatpush.msra.mxu0 %v84
    %126 = vmatpush.msra.mxu0 %v82
    %127 = vmatpush.msra.mxu0 %v80
    %128 = vmatmul.f32.gmra.mxu0 %v78
    %v129 = vpop.f32.mrf.mxu0
    %v130 = vadd.f32 0.0, %v129
    %131 = vmatmul.f32.gmra.mxu0 %v79
    %v132 = vpop.f32.mrf.mxu0
    %v133 = vadd.f32 0.0, %v132
    %134 = vdwg.mxu0
    %135 = vmatpush.msra.mxu0 %v111
    %136 = vmatpush.msra.mxu0 %v109
    %137 = vmatpush.msra.mxu0 %v107
    %138 = vmatpush.msra.mxu0 %v105
    %139 = vmatpush.msra.mxu0 %v103
    %140 = vmatpush.msra.mxu0 %v101
    %141 = vmatpush.msra.mxu0 %v99
    %142 = vmatpush.msra.mxu0 %v97
    %143 = vmatpush.msra.mxu0 %v95
    %144 = vmatpush.msra.mxu0 %v93
    %145 = vmatpush.msra.mxu0 %v91
    %146 = vmatpush.msra.mxu0 %v89
    %147 = vmatpush.msra.mxu0 %v87
    %148 = vmatpush.msra.mxu0 %v85
    %149 = vmatpush.msra.mxu0 %v83
    %150 = vmatpush.msra.mxu0 %v81
    %151 = vmatmul.f32.gmra.mxu0 %v78
    %v152 = vpop.f32.mrf.mxu0
    %v153 = vadd.f32 0.0, %v152
    %154 = vmatmul.f32.gmra.mxu0 %v79
    %v155 = vpop.f32.mrf.mxu0
    %v156 = vadd.f32 0.0, %v155
    %157 = vdwg.mxu0
    %v158 = vadd.f32 %v74, %v130
    %v159 = vadd.f32 %v75, %v153
    %v160 = vadd.f32 %v76, %v133
    %v161 = vadd.f32 %v77, %v156
    %162 = vst [vmem:[#allocation2] sm:$0xff] %v158
    %163 = vst [vmem:[#allocation2 + $0x8] sm:$0xff] %v159
    %164 = vst [vmem:[#allocation2 + $0x10] sm:$0xff] %v160
    %165 = vst [vmem:[#allocation2 + $0x18] sm:$0xff] %v161
    // Predicated region
    $region30: #{tpu_custom_call.1} parent=1 // pred_check
      %p166 = pneg %p60
    $region31: #{tpu_custom_call.1} parent=1 // pred_check_branch
      %168 = sbr.rel (%p166) target = $region33
    $region32: #{tpu_custom_call.1} parent=1 // pred_region
      %v169 = vld [vmem:[#allocation2] sm:$0xff]
      %v170 = vld [vmem:[#allocation2 + $0x8] sm:$0xff]
      %v171 = vld [vmem:[#allocation2 + $0x10] sm:$0xff]
      %v172 = vld [vmem:[#allocation2 + $0x18] sm:$0xff]
      %173 = vst [vmem:[#allocation9] sm:$0xff] %v169
      %174 = vst [vmem:[#allocation9 + $0x8] sm:$0xff] %v170
      %175 = vst [vmem:[#allocation9 + $0x10] sm:$0xff] %v171
      %176 = vst [vmem:[#allocation9 + $0x18] sm:$0xff] %v172
    $region33: #{tpu_custom_call.1} parent=1 // pred_fallthru
      _
    // Predicated region
    $region34: #{tpu_custom_call.1} parent=1 // pred_check
      _
    $region35: #{tpu_custom_call.1} parent=1 // pred_check_branch
      %178 = sbr.rel (0) target = $region37
    $region36: #{tpu_custom_call.1} parent=1 // pred_region
      %180 = vsyncadd [#allocation5], 0
      %s181 = sshll.u32 [#allocation9], 4
      %s182 = int_to_ptr.vmem [resolvable:$true] %s181
      %s183 = sshll.u32 %s3, 4
      %s184 = int_to_ptr.hbm [resolvable:$true] %s183
      %189 = dma.vmem_to_hbm [thread:$0]  %s182, 512, %s184, [#allocation5], 256, 256, 16
    $region37: #{tpu_custom_call.1} parent=1 // pred_fallthru
      _
    // Predicated region
    $region38: #{tpu_custom_call.1} parent=1 // pred_check
      _
    $region39: #{tpu_custom_call.1} parent=1 // pred_check_branch
      %191 = sbr.rel (0) target = $region41
    $region40: #{tpu_custom_call.1} parent=1 // pred_region
      %193 = dma.done [#allocation5], 512
    $region41: #{tpu_custom_call.1} parent=1 // pred_fallthru
      _
    %194 = vsyncpa [#allocation4], 1
    %195 = vsyncpa [#allocation7], 1
    %196 = vsyncpa [#allocation5], 1

</llo_original>
